<compile_context>
chip_gen: v7x
topology: tpu7x:2x2x1
jax: 0.10.0
libtpu: 0.0.40
codegen_flags: <defaults>
</compile_context>

<pallas_src>
import functools
import math

import jax
import jax.numpy as jnp
from jax.experimental import pallas as pl
from jax.experimental.pallas import tpu as pltpu


def _round_up(x, m):
    return ((x + m - 1) // m) * m


def _memory_unit_kernel(bias_ref, index_ref, array_ref, out_ref, *, k_actual):
    # bias_ref:  [TB, E_pad]   bf16
    # index_ref: [K_pad, E_pad] bf16 (resident across the grid)
    # array_ref: [K_pad, TN]   bf16
    # out_ref:   [TB, TN]      f32
    bias = bias_ref[...]
    index = index_ref[...]

    # scores[b, k] = sum_e bias[b, e] * index[k, e]
    # bf16 operands, f32 accumulation on the MXU; no explicit transpose.
    scores = jax.lax.dot_general(
        bias, index,
        dimension_numbers=(((1,), (1,)), ((), ())),
        preferred_element_type=jnp.float32,
    )  # [TB, K_pad] f32

    # Mask padded K slots to -inf so the softmax denominator is exact.
    k_ids = jax.lax.broadcasted_iota(jnp.int32, scores.shape, 1)
    scores = jnp.where(k_ids < k_actual, scores, -jnp.inf)

    # Numerically stable softmax over K, entirely in f32.
    m = jnp.max(scores, axis=-1, keepdims=True)
    e = jnp.exp(scores - m)
    denom = jnp.sum(e, axis=-1, keepdims=True)
    att = e * pl.reciprocal(denom, approx=True)     # EUP, ~1e-4 rel error

    # Weighted combination of memory slots: bf16 MXU operands, f32 accumulate.
    para = jnp.dot(att.astype(jnp.bfloat16), array_ref[...],
                   preferred_element_type=jnp.float32)
    out_ref[...] = para.astype(out_ref.dtype)


def prepare_memory_unit_params(index, array, input_size, output_size):
    """One-time padding + bf16 cast of the parameters (hoisted off the hot path)."""
    K, E = index.shape
    IO = input_size * output_size
    assert array.shape == (K, IO)

    E_pad = _round_up(E, 128)       # lane dim of index / contraction dim
    IO_pad = _round_up(IO, 128)     # lane dim of array / output
    K_pad = _round_up(K, 16)        # bf16 sublane granule; masked in-kernel

    index_p = jnp.zeros((K_pad, E_pad), jnp.bfloat16).at[:K, :E].set(
        index.astype(jnp.bfloat16))
    array_p = jnp.zeros((K_pad, IO_pad), jnp.bfloat16).at[:K, :IO].set(
        array.astype(jnp.bfloat16))

    meta = dict(K=K, E=E, IO=IO, E_pad=E_pad, IO_pad=IO_pad, K_pad=K_pad,
                input_size=input_size, output_size=output_size)
    return index_p, array_p, meta


def _run_pallas(bias_p, index_p, array_p, *, K, TB, TN, E_pad, IO_pad, K_pad,
                B_pad, n_bt, n_io, vmem_limit, cost, single_buffer_consts):
    if single_buffer_consts:
        # index never changes across the grid -> single VMEM buffer.
        index_spec = pl.BlockSpec((K_pad, E_pad), lambda i, j: (0, 0),
                                  pipeline_mode=pl.Buffered(1))
        if n_io == 1:
            array_spec = pl.BlockSpec((K_pad, TN), lambda i, j: (0, j),
                                      pipeline_mode=pl.Buffered(1))
        else:
            array_spec = pl.BlockSpec((K_pad, TN), lambda i, j: (0, j))
    else:
        index_spec = pl.BlockSpec((K_pad, E_pad), lambda i, j: (0, 0))
        array_spec = pl.BlockSpec((K_pad, TN), lambda i, j: (0, j))

    return pl.pallas_call(
        functools.partial(_memory_unit_kernel, k_actual=K),
        out_shape=jax.ShapeDtypeStruct((B_pad, IO_pad), jnp.float32),
        grid=(n_bt, n_io),
        in_specs=[
            pl.BlockSpec((TB, E_pad), lambda i, j: (i, 0)),   # bias tile
            index_spec,                                       # resident index
            array_spec,                                       # array I*O tile
        ],
        out_specs=pl.BlockSpec((TB, TN), lambda i, j: (i, j)),
        compiler_params=pltpu.CompilerParams(
            dimension_semantics=("parallel", "parallel"),
            vmem_limit_bytes=vmem_limit),
        cost_estimate=cost,
    )(bias_p, index_p, array_p)


def memory_unit_forward(bias_emb, index_p, array_p, meta):
    """bias_emb: [B, 1, E]; prepared params -> [B, output_size, input_size]."""
    B = bias_emb.shape[0]
    K, E, IO = meta["K"], meta["E"], meta["IO"]
    E_pad, IO_pad, K_pad = meta["E_pad"], meta["IO_pad"], meta["K_pad"]

    # ---- batch tiling: balanced tiles (no ~2x over-padding); >=2 grid steps
    # when B is big enough so both v7x TensorCores get work; <=512 rows/tile.
    n_bt = max(pl.cdiv(B, 512), 2 if B > 8 else 1)
    TB = _round_up(pl.cdiv(B, n_bt), 8)
    B_pad = _round_up(B, TB)
    n_bt = B_pad // TB

    # ---- I*O tiling: bound the VMEM working set for large array parameters.
    if IO_pad > 4096:
        TN = next(c for c in (4096, 2048, 1024, 512, 256, 128)
                  if IO_pad % c == 0)
    else:
        TN = IO_pad
    n_io = IO_pad // TN

    # Per-call padding of the activation only (params are pre-padded).
    bias_2d = bias_emb.reshape(B, E)
    bias_p = jnp.zeros((B_pad, E_pad), jnp.bfloat16).at[:B, :E].set(
        bias_2d.astype(jnp.bfloat16))

    # ---- explicit VMEM budget (double-buffered streams + resident weights).
    vmem_bytes = (
        2 * TB * E_pad * 2                               # bias tile (bf16, x2)
        + 2 * TB * TN * 4                                # out tile (f32, x2)
        + K_pad * E_pad * 2                              # index (resident)
        + (1 if n_io == 1 else 2) * K_pad * TN * 2       # array tile(s)
    )
    vmem_limit = min(max(2 * vmem_bytes + (4 << 20), 16 << 20), 64 << 20)

    cost = pl.CostEstimate(
        flops=2 * B_pad * K_pad * (E_pad + IO_pad),
        transcendentals=B_pad * K_pad,
        bytes_accessed=int(bias_p.size * 2 + index_p.size * 2
                           + array_p.size * 2 + B_pad * IO_pad * 4),
    )

    kwargs = dict(K=K, TB=TB, TN=TN, E_pad=E_pad, IO_pad=IO_pad, K_pad=K_pad,
                  B_pad=B_pad, n_bt=n_bt, n_io=n_io,
                  vmem_limit=vmem_limit, cost=cost)
    try:
        out_flat = _run_pallas(bias_p, index_p, array_p,
                               single_buffer_consts=True, **kwargs)
    except Exception:
        # Fallback for jax versions where pl.Buffered(1) is not accepted by the
        # Mosaic backend; default double-buffering is functionally identical.
        out_flat = _run_pallas(bias_p, index_p, array_p,
                               single_buffer_consts=False, **kwargs)

    # Strip padding; matches torch: para_new.view(-1, output_size, input_size)
    out = out_flat[:B, :IO]
    return out.reshape(B, meta["output_size"], meta["input_size"])


def xavier_uniform(key, shape):
    fan_in, fan_out = shape[1], shape[0]   # torch xavier on 2D: (fan_out, fan_in)
    bound = math.sqrt(6.0 / (fan_in + fan_out))
    return jax.random.uniform(key, shape, jnp.float32, -bound, bound)


if __name__ == "__main__":
    # Small shapes consistent with the module.
    batch = 2
    emb_size = 32
    input_size = 8
    output_size = 4
    clusters_k = 10

    key = jax.random.PRNGKey(0)
    k_arr, k_idx, k_bias = jax.random.split(key, 3)

    # Deterministic parameter init (same shapes as the nn.Parameters).
    array = xavier_uniform(k_arr, (clusters_k, input_size * output_size))
    index = xavier_uniform(k_idx, (clusters_k, emb_size))
    bias_emb = jax.random.normal(k_bias, (batch, 1, emb_size), jnp.float32)

    # One-time parameter preparation (padding + bf16 cast hoisted out of the
    # per-call path).
    index_p, array_p, meta = prepare_memory_unit_params(
        index, array, input_size, output_size)

    out = memory_unit_forward(bias_emb, index_p, array_p, meta)
    out = jax.block_until_ready(out)
    assert out.shape == (batch, output_size, input_size)

    # Reference check in plain JAX at matching (bf16-operand) precision.
    b16 = bias_emb[:, 0, :].astype(jnp.bfloat16).astype(jnp.float32)
    i16 = index.astype(jnp.bfloat16).astype(jnp.float32)
    a16 = array.astype(jnp.bfloat16).astype(jnp.float32)
    att_ref = jax.nn.softmax(b16 @ i16.T, axis=-1)
    ref = (att_ref.astype(jnp.bfloat16).astype(jnp.float32) @ a16).reshape(
        batch, output_size, input_size)
    assert jnp.allclose(out, ref, atol=3e-3, rtol=3e-2), "mismatch vs reference"

    print("KERNEL_OK")
</pallas_src>

<mosaic_0001>
module attributes {stable_mosaic.version = 11 : i64} {
  func.func @_memory_unit_kernel(%arg0: i32, %arg1: i32, %arg2: memref<8x128xbf16, #tpu.memory_space<vmem>>, %arg3: memref<16x128xbf16, #tpu.memory_space<vmem>>, %arg4: memref<16x128xbf16, #tpu.memory_space<vmem>>, %arg5: memref<8x128xf32, #tpu.memory_space<vmem>>) attributes {dimension_semantics = [#tpu.dimension_semantics<parallel>, #tpu.dimension_semantics<parallel>], iteration_bounds = array<i64: 1, 1>, scalar_prefetch = 0 : i64, scratch_operands = 0 : i64, tpu.core_type = #tpu.core_type<tc>, window_params = [{transform_indices = @transform_0, window_bounds = array<i64: 8, 128>}, {pipeline_mode = #tpu.pipeline_mode<synchronous>, transform_indices = @transform_1, window_bounds = array<i64: 16, 128>}, {pipeline_mode = #tpu.pipeline_mode<synchronous>, transform_indices = @transform_2, window_bounds = array<i64: 16, 128>}, {transform_indices = @transform_3, window_bounds = array<i64: 8, 128>}]} {
    %c0 = arith.constant 0 : index
    %c0_0 = arith.constant 0 : index
    %0 = vector.load %arg2[%c0, %c0_0] : memref<8x128xbf16, #tpu.memory_space<vmem>>, vector<8x128xbf16>
    %c0_1 = arith.constant 0 : index
    %c0_2 = arith.constant 0 : index
    %1 = vector.load %arg3[%c0_1, %c0_2] : memref<16x128xbf16, #tpu.memory_space<vmem>>, vector<16x128xbf16>
    %cst = arith.constant dense<0.000000e+00> : vector<8x16xf32>
    %2 = tpu.matmul %0, %1, %cst {dimension_numbers = #tpu.dot_dimension_numbers<[1], [1], [0], [0], [0, 0, 1, 0], [], []>} : vector<8x128xbf16>, vector<16x128xbf16>, vector<8x16xf32> -> vector<8x16xf32>
    %3 = tpu.iota {dimensions = array<i32: 1>} : vector<8x16xi32>
    %c10_i32 = arith.constant 10 : i32
    %4 = vector.broadcast %c10_i32 : i32 to vector<8x16xi32>
    %5 = arith.cmpi slt, %3, %4 : vector<8x16xi32>
    %cst_3 = arith.constant 0xFF800000 : f32
    %6 = vector.broadcast %cst_3 : f32 to vector<8x16xf32>
    %7 = arith.select %5, %2, %6 : vector<8x16xi1>, vector<8x16xf32>
    %cst_4 = arith.constant dense<0xFF800000> : vector<8xf32>
    %8 = vector.multi_reduction <maximumf>, %7, %cst_4 [1] : vector<8x16xf32> to vector<8xf32>
    %9 = vector.shape_cast %8 : vector<8xf32> to vector<8x1xf32>
    %10 = vector.broadcast %9 : vector<8x1xf32> to vector<8x16xf32>
    %11 = arith.subf %7, %10 : vector<8x16xf32>
    %12 = math.exp %11 : vector<8x16xf32>
    %cst_5 = arith.constant dense<0.000000e+00> : vector<8xf32>
    %13 = vector.multi_reduction <add>, %12, %cst_5 [1] : vector<8x16xf32> to vector<8xf32>
    %14 = vector.shape_cast %13 : vector<8xf32> to vector<8x1xf32>
    %15 = tpu.reciprocal %14 {approx = true} : vector<8x1xf32> -> vector<8x1xf32>
    %16 = vector.broadcast %15 : vector<8x1xf32> to vector<8x16xf32>
    %17 = arith.mulf %12, %16 : vector<8x16xf32>
    %18 = arith.truncf %17 : vector<8x16xf32> to vector<8x16xbf16>
    %c0_6 = arith.constant 0 : index
    %c0_7 = arith.constant 0 : index
    %19 = vector.load %arg4[%c0_6, %c0_7] : memref<16x128xbf16, #tpu.memory_space<vmem>>, vector<16x128xbf16>
    %cst_8 = arith.constant dense<0.000000e+00> : vector<8x128xf32>
    %20 = tpu.matmul %18, %19, %cst_8 {dimension_numbers = #tpu.dot_dimension_numbers<[1], [0], [0], [1], [0, 0, 1, 1], [], []>} : vector<8x16xbf16>, vector<16x128xbf16>, vector<8x128xf32> -> vector<8x128xf32>
    %c0_9 = arith.constant 0 : index
    %c0_10 = arith.constant 0 : index
    %21 = vector.load %arg5[%c0_9, %c0_10] : memref<8x128xf32, #tpu.memory_space<vmem>>, vector<8x128xf32>
    tpu.vector_store %arg5[%c0_9, %c0_10], %20 {strides = array<i32>} : memref<8x128xf32, #tpu.memory_space<vmem>>, vector<8x128xf32>,
    return
  }
  func.func @transform_0(%arg0: i32, %arg1: i32) -> (i32, i32) {
    %c0_i32 = arith.constant 0 : i32
    %c0_i32_0 = arith.constant 0 : i32
    return %arg0, %c0_i32 : i32, i32
  }
  func.func @transform_1(%arg0: i32, %arg1: i32) -> (i32, i32) {
    %c0_i32 = arith.constant 0 : i32
    %c0_i32_0 = arith.constant 0 : i32
    %c0_i32_1 = arith.constant 0 : i32
    return %c0_i32, %c0_i32_0 : i32, i32
  }
  func.func @transform_2(%arg0: i32, %arg1: i32) -> (i32, i32) {
    %c0_i32 = arith.constant 0 : i32
    %c0_i32_0 = arith.constant 0 : i32
    return %c0_i32, %arg1 : i32, i32
  }
  func.func @transform_3(%arg0: i32, %arg1: i32) -> (i32, i32) {
    %c0_i32 = arith.constant 0 : i32
    return %arg0, %arg1 : i32, i32
  }
}

module attributes {stable_mosaic.version = 11 : i64} {
  func.func @_memory_unit_kernel(%arg0: i32, %arg1: i32, %arg2: memref<8x128xbf16, #tpu.memory_space<vmem>>, %arg3: memref<16x128xbf16, #tpu.memory_space<vmem>>, %arg4: memref<16x128xbf16, #tpu.memory_space<vmem>>, %arg5: memref<8x128xf32, #tpu.memory_space<vmem>>) attributes {dimension_semantics = [#tpu.dimension_semantics<parallel>, #tpu.dimension_semantics<parallel>], iteration_bounds = array<i64: 1, 1>, scalar_prefetch = 0 : i64, scratch_operands = 0 : i64, tpu.core_type = #tpu.core_type<tc>, window_params = [{transform_indices = @transform_0, window_bounds = array<i64: 8, 128>}, {pipeline_mode = #tpu.pipeline_mode<synchronous>, transform_indices = @transform_1, window_bounds = array<i64: 16, 128>}, {transform_indices = @transform_2, window_bounds = array<i64: 16, 128>}, {transform_indices = @transform_3, window_bounds = array<i64: 8, 128>}]} {
    %c0 = arith.constant 0 : index
    %c0_0 = arith.constant 0 : index
    %0 = vector.load %arg2[%c0, %c0_0] : memref<8x128xbf16, #tpu.memory_space<vmem>>, vector<8x128xbf16>
    %c0_1 = arith.constant 0 : index
    %c0_2 = arith.constant 0 : index
    %1 = vector.load %arg3[%c0_1, %c0_2] : memref<16x128xbf16, #tpu.memory_space<vmem>>, vector<16x128xbf16>
    %cst = arith.constant dense<0.000000e+00> : vector<8x16xf32>
    %2 = tpu.matmul %0, %1, %cst {dimension_numbers = #tpu.dot_dimension_numbers<[1], [1], [0], [0], [0, 0, 1, 0], [], []>} : vector<8x128xbf16>, vector<16x128xbf16>, vector<8x16xf32> -> vector<8x16xf32>
    %3 = tpu.iota {dimensions = array<i32: 1>} : vector<8x16xi32>
    %c10_i32 = arith.constant 10 : i32
    %4 = vector.broadcast %c10_i32 : i32 to vector<8x16xi32>
    %5 = arith.cmpi slt, %3, %4 : vector<8x16xi32>
    %cst_3 = arith.constant 0xFF800000 : f32
    %6 = vector.broadcast %cst_3 : f32 to vector<8x16xf32>
    %7 = arith.select %5, %2, %6 : vector<8x16xi1>, vector<8x16xf32>
    %cst_4 = arith.constant dense<0xFF800000> : vector<8xf32>
    %8 = vector.multi_reduction <maximumf>, %7, %cst_4 [1] : vector<8x16xf32> to vector<8xf32>
    %9 = vector.shape_cast %8 : vector<8xf32> to vector<8x1xf32>
    %10 = vector.broadcast %9 : vector<8x1xf32> to vector<8x16xf32>
    %11 = arith.subf %7, %10 : vector<8x16xf32>
    %12 = math.exp %11 : vector<8x16xf32>
    %cst_5 = arith.constant dense<0.000000e+00> : vector<8xf32>
    %13 = vector.multi_reduction <add>, %12, %cst_5 [1] : vector<8x16xf32> to vector<8xf32>
    %14 = vector.shape_cast %13 : vector<8xf32> to vector<8x1xf32>
    %15 = tpu.reciprocal %14 {approx = true} : vector<8x1xf32> -> vector<8x1xf32>
    %16 = vector.broadcast %15 : vector<8x1xf32> to vector<8x16xf32>
    %17 = arith.mulf %12, %16 : vector<8x16xf32>
    %18 = arith.truncf %17 : vector<8x16xf32> to vector<8x16xbf16>
    %c0_6 = arith.constant 0 : index
    %c0_7 = arith.constant 0 : index
    %19 = vector.load %arg4[%c0_6, %c0_7] : memref<16x128xbf16, #tpu.memory_space<vmem>>, vector<16x128xbf16>
    %cst_8 = arith.constant dense<0.000000e+00> : vector<8x128xf32>
    %20 = tpu.matmul %18, %19, %cst_8 {dimension_numbers = #tpu.dot_dimension_numbers<[1], [0], [0], [1], [0, 0, 1, 1], [], []>} : vector<8x16xbf16>, vector<16x128xbf16>, vector<8x128xf32> -> vector<8x128xf32>
    %c0_9 = arith.constant 0 : index
    %c0_10 = arith.constant 0 : index
    %21 = vector.load %arg5[%c0_9, %c0_10] : memref<8x128xf32, #tpu.memory_space<vmem>>, vector<8x128xf32>
    tpu.vector_store %arg5[%c0_9, %c0_10], %20 {strides = array<i32>} : memref<8x128xf32, #tpu.memory_space<vmem>>, vector<8x128xf32>,
    return
  }
  func.func @transform_0(%arg0: i32, %arg1: i32) -> (i32, i32) {
    %c0_i32 = arith.constant 0 : i32
    %c0_i32_0 = arith.constant 0 : i32
    return %arg0, %c0_i32 : i32, i32
  }
  func.func @transform_1(%arg0: i32, %arg1: i32) -> (i32, i32) {
    %c0_i32 = arith.constant 0 : i32
    %c0_i32_0 = arith.constant 0 : i32
    %c0_i32_1 = arith.constant 0 : i32
    return %c0_i32, %c0_i32_0 : i32, i32
  }
  func.func @transform_2(%arg0: i32, %arg1: i32) -> (i32, i32) {
    %c0_i32 = arith.constant 0 : i32
    %c0_i32_0 = arith.constant 0 : i32
    return %c0_i32, %arg1 : i32, i32
  }
  func.func @transform_3(%arg0: i32, %arg1: i32) -> (i32, i32) {
    %c0_i32 = arith.constant 0 : i32
    return %arg0, %arg1 : i32, i32
  }
}

</mosaic_0001>

<llo_original>
// kernel: tpu_custom_call.1
$region0: #{tpu_custom_call.1}
  #allocation0 [shape = 'u32[]', space=smem, size = 0x4, offset = 0x4, fixed_abs, tag = 'smem constant byte address 0x4 - core index']
  #allocation1 [shape = 'u32[144,128]{1,0:T(1,128)}', space=vmem, size = 0x12000, scoped, tag = 'internal scratch']
  %s0 = inlined_call_operand.hbm [shape: bf16[8,128], index: 0, kind: input, shape index: {}]
  %s1 = inlined_call_operand.hbm [shape: bf16[16,128], index: 1, kind: input, shape index: {}]
  %s2 = inlined_call_operand.hbm [shape: bf16[16,128], index: 2, kind: input, shape index: {}]
  %s3 = inlined_call_operand.hbm [shape: f32[8,128], index: 3, kind: output, shape index: {}]
  %s4 = sld [smem:[#allocation0]]
  $region34: #{tpu_custom_call.1} parent=0
    _
  %s6 = ssub.s32 1, %s4
  %s7 = scalar_select 0, %s6, %s4
  $region1: #{tpu_custom_call.1} parent=0
    #allocation2 [shape = 'u8[2048]{0}', space=vmem, size = 0x800, scoped, tag = 'input window, operand 0, single buffered']
    #allocation3 [shape = 's32[1]{0}', space=sflag, size = 0x4, scoped, tag = 'scoped memory for tpu_custom_call.1']
    #allocation4 [shape = 's32[1]{0}', space=sflag, size = 0x4, scoped, tag = 'scoped memory for tpu_custom_call.1']
    #allocation5 [shape = 'u8[4096]{0}', space=vmem, size = 0x1000, scoped, tag = 'input window, operand 1, single buffered']
    #allocation6 [shape = 's32[1]{0}', space=sflag, size = 0x4, scoped, tag = 'scoped memory for tpu_custom_call.1']
    #allocation7 [shape = 'u8[4096]{0}', space=vmem, size = 0x1000, scoped, tag = 'input window, operand 2, single buffered']
    #allocation8 [shape = 'u8[4096]{0}', space=vmem, size = 0x1000, scoped, tag = 'output window, operand 0, single buffered']
    %8 = vsyncpa [#allocation3], 0
    %9 = vsyncpa [#allocation6], 0
    %10 = vsyncpa [#allocation4], 0
    // Predicated region
    $region2: #{tpu_custom_call.1} parent=1 // pred_check
      _
    $region3: #{tpu_custom_call.1} parent=1 // pred_check_branch
      %12 = sbr.rel (0) target = $region5
    $region4: #{tpu_custom_call.1} parent=1 // pred_region
      %s14 = ssub.s32 64, 64
      %15 = vsyncadd [#allocation3], %s14
      %s17 = sshll.u32 [#allocation2], 4
      %s18 = int_to_ptr.vmem [resolvable:$true] %s17
      %20 = dma.hbm_to_vmem [thread:$0]  %s0, 64, %s18, [#allocation3]
    $region5: #{tpu_custom_call.1} parent=1 // pred_fallthru
      _
    // Predicated region
    $region6: #{tpu_custom_call.1} parent=1 // pred_check
      _
    $region7: #{tpu_custom_call.1} parent=1 // pred_check_branch
      %22 = sbr.rel (0) target = $region9
    $region8: #{tpu_custom_call.1} parent=1 // pred_region
      %s24 = ssub.s32 128, 128
      %25 = vsyncadd [#allocation6], %s24
      %s26 = sshll.u32 [#allocation5], 4
      %s27 = int_to_ptr.vmem [resolvable:$true] %s26
      %32 = dma.hbm_to_vmem [thread:$0]  %s1, 128, %s27, [#allocation6], 64, 64, 4
    $region9: #{tpu_custom_call.1} parent=1 // pred_fallthru
      _
    // Predicated region
    $region10: #{tpu_custom_call.1} parent=1 // pred_check
      _
    $region11: #{tpu_custom_call.1} parent=1 // pred_check_branch
      %34 = sbr.rel (0) target = $region13
    $region12: #{tpu_custom_call.1} parent=1 // pred_region
      %s36 = ssub.s32 128, 128
      %37 = vsyncadd [#allocation6], %s36
      %s38 = sshll.u32 [#allocation7], 4
      %s39 = int_to_ptr.vmem [resolvable:$true] %s38
      %44 = dma.hbm_to_vmem [thread:$0]  %s2, 128, %s39, [#allocation6], 64, 64, 4
    $region13: #{tpu_custom_call.1} parent=1 // pred_fallthru
      _
    // Predicated region
    $region14: #{tpu_custom_call.1} parent=1 // pred_check
      _
    $region15: #{tpu_custom_call.1} parent=1 // pred_check_branch
      %46 = sbr.rel (0) target = $region17
    $region16: #{tpu_custom_call.1} parent=1 // pred_region
      %47 = dma.done [#allocation3], 64
    $region17: #{tpu_custom_call.1} parent=1 // pred_fallthru
      _
    // Predicated region
    $region18: #{tpu_custom_call.1} parent=1 // pred_check
      _
    $region19: #{tpu_custom_call.1} parent=1 // pred_check_branch
      %49 = sbr.rel (0) target = $region21
    $region20: #{tpu_custom_call.1} parent=1 // pred_region
      %50 = dma.done [#allocation6], 128
    $region21: #{tpu_custom_call.1} parent=1 // pred_fallthru
      _
    // Predicated region
    $region22: #{tpu_custom_call.1} parent=1 // pred_check
      _
    $region23: #{tpu_custom_call.1} parent=1 // pred_check_branch
      %52 = sbr.rel (0) target = $region25
    $region24: #{tpu_custom_call.1} parent=1 // pred_region
      %53 = dma.done [#allocation6], 128
    $region25: #{tpu_custom_call.1} parent=1 // pred_fallthru
      _
    %v55 = vld [vmem:[#allocation2] sm:$0xf]
    %v56 = vld [vmem:[#allocation5] sm:$0xf]
    %v57 = vld [vmem:[#allocation5 + $0x4] sm:$0xf]
    %v60 = vunpack.c.l.b16 %v56
    %v61 = vunpack.c.l.b16 %v57
    %v62 = vpack.c.b16 %v61, %v60
    %64 = vmatprep.subr.bf16.mxu0 0
    %65 = vmatpush1.bf16.xpose.msra.mxu0 %v62
    %66 = vmatprep.subr.bf16.mxu0 0
    %67 = vmatpush1.bf16.xpose.msra.mxu0 0
    %68 = vmatprep.subr.bf16.mxu0 0
    %69 = vmatpush1.bf16.xpose.msra.mxu0 0
    %70 = vmatprep.subr.bf16.mxu0 0
    %71 = vmatpush1.bf16.xpose.msra.mxu0 0
    %72 = vmatprep.subr.bf16.mxu0 0
    %73 = vmatpush1.bf16.xpose.msra.mxu0 0
    %74 = vmatprep.subr.bf16.mxu0 0
    %75 = vmatpush1.bf16.xpose.msra.mxu0 0
    %76 = vmatprep.subr.bf16.mxu0 0
    %77 = vmatpush1.bf16.xpose.msra.mxu0 0
    %78 = vmatprep.subr.bf16.mxu0 0
    %79 = vmatpush1.bf16.xpose.msra.mxu0 0
    %80 = vmatprep.subr.bf16.mxu0 0
    %81 = vmatpush1.bf16.xpose.msra.mxu0 0
    %82 = vmatprep.subr.bf16.mxu0 0
    %83 = vmatpush1.bf16.xpose.msra.mxu0 0
    %84 = vmatprep.subr.bf16.mxu0 0
    %85 = vmatpush1.bf16.xpose.msra.mxu0 0
    %86 = vmatprep.subr.bf16.mxu0 0
    %87 = vmatpush1.bf16.xpose.msra.mxu0 0
    %88 = vmatprep.subr.bf16.mxu0 0
    %89 = vmatpush1.bf16.xpose.msra.mxu0 0
    %90 = vmatprep.subr.bf16.mxu0 0
    %91 = vmatpush1.bf16.xpose.msra.mxu0 0
    %92 = vmatprep.subr.bf16.mxu0 0
    %93 = vmatpush1.bf16.xpose.msra.mxu0 0
    %94 = vmatprep.subr.bf16.mxu0 0
    %95 = vmatpush1.bf16.xpose.msra.mxu0 0
    %96 = vmatprep.mubr.bf16.mxu0 0
    %97 = vmatmul.mubr.bf16.gmra.mrb[0].mxu0 %v55
    %v98 = vpop.f32.mrb[0].mxu0
    %v99 = vadd.f32 0.0, %v98
    %v100 = vpop.f32.mrb[0].mxu0
    %v101 = vpop.f32.mrb[0].mxu0
    %v102 = vpop.f32.mrb[0].mxu0
    %103 = vdwg.mxu0
    %v104 = vlaneseq
    %v105 = vand.u32 %v104, 127
    %vm106 = vcmp.lt.s32.totalorder %v105, 10
    %v107 = vsel %vm106, %v99, -inf
    %vm108 = vcmask 130048
    %v109 = vsel %vm108, %v107, -inf
    %110 = vmax.xlane.f32.xlu0 %v109
    %v111 = vpop.xlane.xlu0 %110
    %v112 = vsub.f32 %v107, %v111
    %v113 = vmul.f32 %v112, 1.442695
    %v114 = vpow.pop %v113
    %v115 = vsel %vm108, %v114, 0.0
    %116 = vadd.xlane.f32.xlu0 %v115
    %v117 = vpop.xlane.xlu0 %116
    %v118 = vrcp.pop %v117
    %v119 = vmul.f32 %v114, %v118
    %v120 = vpack.c.bf16 %v119, %v119
    %v121 = vld [vmem:[#allocation7] sm:$0xf]
    %v122 = vld [vmem:[#allocation7 + $0x4] sm:$0xf]
    %v125 = vunpack.c.l.b16 %v121
    %v126 = vunpack.c.l.b16 %v122
    %v127 = vpack.c.b16 %v126, %v125
    %v130 = vsel %vm108, %v120, 0
    %132 = vmatprep.subr.bf16.mxu0 0
    %133 = vmatpush1.bf16.msra.mxu0 %v127
    %134 = vmatprep.subr.bf16.mxu0 0
    %135 = vmatpush1.bf16.msra.mxu0 0
    %136 = vmatprep.subr.bf16.mxu0 0
    %137 = vmatpush1.bf16.msra.mxu0 0
    %138 = vmatprep.subr.bf16.mxu0 0
    %139 = vmatpush1.bf16.msra.mxu0 0
    %140 = vmatprep.subr.bf16.mxu0 0
    %141 = vmatpush1.bf16.msra.mxu0 0
    %142 = vmatprep.subr.bf16.mxu0 0
    %143 = vmatpush1.bf16.msra.mxu0 0
    %144 = vmatprep.subr.bf16.mxu0 0
    %145 = vmatpush1.bf16.msra.mxu0 0
    %146 = vmatprep.subr.bf16.mxu0 0
    %147 = vmatpush1.bf16.msra.mxu0 0
    %148 = vmatprep.subr.bf16.mxu0 0
    %149 = vmatpush1.bf16.msra.mxu0 0
    %150 = vmatprep.subr.bf16.mxu0 0
    %151 = vmatpush1.bf16.msra.mxu0 0
    %152 = vmatprep.subr.bf16.mxu0 0
    %153 = vmatpush1.bf16.msra.mxu0 0
    %154 = vmatprep.subr.bf16.mxu0 0
    %155 = vmatpush1.bf16.msra.mxu0 0
    %156 = vmatprep.subr.bf16.mxu0 0
    %157 = vmatpush1.bf16.msra.mxu0 0
    %158 = vmatprep.subr.bf16.mxu0 0
    %159 = vmatpush1.bf16.msra.mxu0 0
    %160 = vmatprep.subr.bf16.mxu0 0
    %161 = vmatpush1.bf16.msra.mxu0 0
    %162 = vmatprep.subr.bf16.mxu0 0
    %163 = vmatpush1.bf16.msra.mxu0 0
    %164 = vmatprep.mubr.bf16.mxu0 0
    %165 = vmatmul.mubr.bf16.gmra.mrb[0].mxu0 %v130
    %v166 = vpop.f32.mrb[0].mxu0
    %v167 = vadd.f32 0.0, %v166
    %v168 = vpop.f32.mrb[0].mxu0
    %v169 = vpop.f32.mrb[0].mxu0
    %v170 = vpop.f32.mrb[0].mxu0
    %171 = vdwg.mxu0
    %172 = vst [vmem:[#allocation8] sm:$0xff] %v167
    // Predicated region
    $region26: #{tpu_custom_call.1} parent=1 // pred_check
      _
    $region27: #{tpu_custom_call.1} parent=1 // pred_check_branch
      %174 = sbr.rel (0) target = $region29
    $region28: #{tpu_custom_call.1} parent=1 // pred_region
      %s176 = ssub.s32 128, 128
      %177 = vsyncadd [#allocation4], %s176
      %s179 = sshll.u32 [#allocation8], 4
      %s180 = int_to_ptr.vmem [resolvable:$true] %s179
      %182 = dma.vmem_to_hbm [thread:$0]  %s180, 128, %s3, [#allocation4]
    $region29: #{tpu_custom_call.1} parent=1 // pred_fallthru
      _
    // Predicated region
    $region30: #{tpu_custom_call.1} parent=1 // pred_check
      _
    $region31: #{tpu_custom_call.1} parent=1 // pred_check_branch
      %184 = sbr.rel (0) target = $region33
    $region32: #{tpu_custom_call.1} parent=1 // pred_region
      %185 = dma.done [#allocation4], 128
    $region33: #{tpu_custom_call.1} parent=1 // pred_fallthru
      _
    %186 = vsyncpa [#allocation3], 1
    %187 = vsyncpa [#allocation6], 1
    %188 = vsyncpa [#allocation4], 1

// kernel: tpu_custom_call.1
$region0: #{tpu_custom_call.1}
  #allocation0 [shape = 'u32[]', space=smem, size = 0x4, offset = 0x4, fixed_abs, tag = 'smem constant byte address 0x4 - core index']
  #allocation1 [shape = 'u32[144,128]{1,0:T(1,128)}', space=vmem, size = 0x12000, scoped, tag = 'internal scratch']
  %s0 = inlined_call_operand.hbm [shape: bf16[8,128], index: 0, kind: input, shape index: {}]
  %s1 = inlined_call_operand.hbm [shape: bf16[16,128], index: 1, kind: input, shape index: {}]
  %s2 = inlined_call_operand.hbm [shape: bf16[16,128], index: 2, kind: input, shape index: {}]
  %s3 = inlined_call_operand.hbm [shape: f32[8,128], index: 3, kind: output, shape index: {}]
  %s4 = sld [smem:[#allocation0]]
  $region34: #{tpu_custom_call.1} parent=0
    _
  %s6 = ssub.s32 1, %s4
  %s7 = scalar_select 0, %s6, %s4
  $region1: #{tpu_custom_call.1} parent=0
    #allocation2 [shape = 'u8[2048]{0}', space=vmem, size = 0x800, scoped, tag = 'input window, operand 0, single buffered']
    #allocation3 [shape = 's32[1]{0}', space=sflag, size = 0x4, scoped, tag = 'scoped memory for tpu_custom_call.1']
    #allocation4 [shape = 's32[1]{0}', space=sflag, size = 0x4, scoped, tag = 'scoped memory for tpu_custom_call.1']
    #allocation5 [shape = 'u8[4096]{0}', space=vmem, size = 0x1000, scoped, tag = 'input window, operand 1, single buffered']
    #allocation6 [shape = 's32[1]{0}', space=sflag, size = 0x4, scoped, tag = 'scoped memory for tpu_custom_call.1']
    #allocation7 [shape = 'u8[4096]{0}', space=vmem, size = 0x1000, scoped, tag = 'input window, operand 2, single buffered']
    #allocation8 [shape = 'u8[4096]{0}', space=vmem, size = 0x1000, scoped, tag = 'output window, operand 0, single buffered']
    %8 = vsyncpa [#allocation3], 0
    %9 = vsyncpa [#allocation6], 0
    %10 = vsyncpa [#allocation4], 0
    // Predicated region
    $region2: #{tpu_custom_call.1} parent=1 // pred_check
      _
    $region3: #{tpu_custom_call.1} parent=1 // pred_check_branch
      %12 = sbr.rel (0) target = $region5
    $region4: #{tpu_custom_call.1} parent=1 // pred_region
      %s14 = ssub.s32 64, 64
      %15 = vsyncadd [#allocation3], %s14
      %s17 = sshll.u32 [#allocation2], 4
      %s18 = int_to_ptr.vmem [resolvable:$true] %s17
      %20 = dma.hbm_to_vmem [thread:$0]  %s0, 64, %s18, [#allocation3]
    $region5: #{tpu_custom_call.1} parent=1 // pred_fallthru
      _
    // Predicated region
    $region6: #{tpu_custom_call.1} parent=1 // pred_check
      _
    $region7: #{tpu_custom_call.1} parent=1 // pred_check_branch
      %22 = sbr.rel (0) target = $region9
    $region8: #{tpu_custom_call.1} parent=1 // pred_region
      %s24 = ssub.s32 128, 128
      %25 = vsyncadd [#allocation6], %s24
      %s26 = sshll.u32 [#allocation5], 4
      %s27 = int_to_ptr.vmem [resolvable:$true] %s26
      %32 = dma.hbm_to_vmem [thread:$0]  %s1, 128, %s27, [#allocation6], 64, 64, 4
    $region9: #{tpu_custom_call.1} parent=1 // pred_fallthru
      _
    // Predicated region
    $region10: #{tpu_custom_call.1} parent=1 // pred_check
      _
    $region11: #{tpu_custom_call.1} parent=1 // pred_check_branch
      %34 = sbr.rel (0) target = $region13
    $region12: #{tpu_custom_call.1} parent=1 // pred_region
      %s36 = ssub.s32 128, 128
      %37 = vsyncadd [#allocation6], %s36
      %s38 = sshll.u32 [#allocation7], 4
      %s39 = int_to_ptr.vmem [resolvable:$true] %s38
      %44 = dma.hbm_to_vmem [thread:$0]  %s2, 128, %s39, [#allocation6], 64, 64, 4
    $region13: #{tpu_custom_call.1} parent=1 // pred_fallthru
      _
    // Predicated region
    $region14: #{tpu_custom_call.1} parent=1 // pred_check
      _
    $region15: #{tpu_custom_call.1} parent=1 // pred_check_branch
      %46 = sbr.rel (0) target = $region17
    $region16: #{tpu_custom_call.1} parent=1 // pred_region
      %47 = dma.done [#allocation3], 64
    $region17: #{tpu_custom_call.1} parent=1 // pred_fallthru
      _
    // Predicated region
    $region18: #{tpu_custom_call.1} parent=1 // pred_check
      _
    $region19: #{tpu_custom_call.1} parent=1 // pred_check_branch
      %49 = sbr.rel (0) target = $region21
    $region20: #{tpu_custom_call.1} parent=1 // pred_region
      %50 = dma.done [#allocation6], 128
    $region21: #{tpu_custom_call.1} parent=1 // pred_fallthru
      _
    // Predicated region
    $region22: #{tpu_custom_call.1} parent=1 // pred_check
      _
    $region23: #{tpu_custom_call.1} parent=1 // pred_check_branch
      %52 = sbr.rel (0) target = $region25
    $region24: #{tpu_custom_call.1} parent=1 // pred_region
      %53 = dma.done [#allocation6], 128
    $region25: #{tpu_custom_call.1} parent=1 // pred_fallthru
      _
    %v55 = vld [vmem:[#allocation2] sm:$0xf]
    %v56 = vld [vmem:[#allocation5] sm:$0xf]
    %v57 = vld [vmem:[#allocation5 + $0x4] sm:$0xf]
    %v60 = vunpack.c.l.b16 %v56
    %v61 = vunpack.c.l.b16 %v57
    %v62 = vpack.c.b16 %v61, %v60
    %64 = vmatprep.subr.bf16.mxu0 0
    %65 = vmatpush1.bf16.xpose.msra.mxu0 %v62
    %66 = vmatprep.subr.bf16.mxu0 0
    %67 = vmatpush1.bf16.xpose.msra.mxu0 0
    %68 = vmatprep.subr.bf16.mxu0 0
    %69 = vmatpush1.bf16.xpose.msra.mxu0 0
    %70 = vmatprep.subr.bf16.mxu0 0
    %71 = vmatpush1.bf16.xpose.msra.mxu0 0
    %72 = vmatprep.subr.bf16.mxu0 0
    %73 = vmatpush1.bf16.xpose.msra.mxu0 0
    %74 = vmatprep.subr.bf16.mxu0 0
    %75 = vmatpush1.bf16.xpose.msra.mxu0 0
    %76 = vmatprep.subr.bf16.mxu0 0
    %77 = vmatpush1.bf16.xpose.msra.mxu0 0
    %78 = vmatprep.subr.bf16.mxu0 0
    %79 = vmatpush1.bf16.xpose.msra.mxu0 0
    %80 = vmatprep.subr.bf16.mxu0 0
    %81 = vmatpush1.bf16.xpose.msra.mxu0 0
    %82 = vmatprep.subr.bf16.mxu0 0
    %83 = vmatpush1.bf16.xpose.msra.mxu0 0
    %84 = vmatprep.subr.bf16.mxu0 0
    %85 = vmatpush1.bf16.xpose.msra.mxu0 0
    %86 = vmatprep.subr.bf16.mxu0 0
    %87 = vmatpush1.bf16.xpose.msra.mxu0 0
    %88 = vmatprep.subr.bf16.mxu0 0
    %89 = vmatpush1.bf16.xpose.msra.mxu0 0
    %90 = vmatprep.subr.bf16.mxu0 0
    %91 = vmatpush1.bf16.xpose.msra.mxu0 0
    %92 = vmatprep.subr.bf16.mxu0 0
    %93 = vmatpush1.bf16.xpose.msra.mxu0 0
    %94 = vmatprep.subr.bf16.mxu0 0
    %95 = vmatpush1.bf16.xpose.msra.mxu0 0
    %96 = vmatprep.mubr.bf16.mxu0 0
    %97 = vmatmul.mubr.bf16.gmra.mrb[0].mxu0 %v55
    %v98 = vpop.f32.mrb[0].mxu0
    %v99 = vadd.f32 0.0, %v98
    %v100 = vpop.f32.mrb[0].mxu0
    %v101 = vpop.f32.mrb[0].mxu0
    %v102 = vpop.f32.mrb[0].mxu0
    %103 = vdwg.mxu0
    %v104 = vlaneseq
    %v105 = vand.u32 %v104, 127
    %vm106 = vcmp.lt.s32.totalorder %v105, 10
    %v107 = vsel %vm106, %v99, -inf
    %vm108 = vcmask 130048
    %v109 = vsel %vm108, %v107, -inf
    %110 = vmax.xlane.f32.xlu0 %v109
    %v111 = vpop.xlane.xlu0 %110
    %v112 = vsub.f32 %v107, %v111
    %v113 = vmul.f32 %v112, 1.442695
    %v114 = vpow.pop %v113
    %v115 = vsel %vm108, %v114, 0.0
    %116 = vadd.xlane.f32.xlu0 %v115
    %v117 = vpop.xlane.xlu0 %116
    %v118 = vrcp.pop %v117
    %v119 = vmul.f32 %v114, %v118
    %v120 = vpack.c.bf16 %v119, %v119
    %v121 = vld [vmem:[#allocation7] sm:$0xf]
    %v122 = vld [vmem:[#allocation7 + $0x4] sm:$0xf]
    %v125 = vunpack.c.l.b16 %v121
    %v126 = vunpack.c.l.b16 %v122
    %v127 = vpack.c.b16 %v126, %v125
    %v130 = vsel %vm108, %v120, 0
    %132 = vmatprep.subr.bf16.mxu0 0
    %133 = vmatpush1.bf16.msra.mxu0 %v127
    %134 = vmatprep.subr.bf16.mxu0 0
    %135 = vmatpush1.bf16.msra.mxu0 0
    %136 = vmatprep.subr.bf16.mxu0 0
    %137 = vmatpush1.bf16.msra.mxu0 0
    %138 = vmatprep.subr.bf16.mxu0 0
    %139 = vmatpush1.bf16.msra.mxu0 0
    %140 = vmatprep.subr.bf16.mxu0 0
    %141 = vmatpush1.bf16.msra.mxu0 0
    %142 = vmatprep.subr.bf16.mxu0 0
    %143 = vmatpush1.bf16.msra.mxu0 0
    %144 = vmatprep.subr.bf16.mxu0 0
    %145 = vmatpush1.bf16.msra.mxu0 0
    %146 = vmatprep.subr.bf16.mxu0 0
    %147 = vmatpush1.bf16.msra.mxu0 0
    %148 = vmatprep.subr.bf16.mxu0 0
    %149 = vmatpush1.bf16.msra.mxu0 0
    %150 = vmatprep.subr.bf16.mxu0 0
    %151 = vmatpush1.bf16.msra.mxu0 0
    %152 = vmatprep.subr.bf16.mxu0 0
    %153 = vmatpush1.bf16.msra.mxu0 0
    %154 = vmatprep.subr.bf16.mxu0 0
    %155 = vmatpush1.bf16.msra.mxu0 0
    %156 = vmatprep.subr.bf16.mxu0 0
    %157 = vmatpush1.bf16.msra.mxu0 0
    %158 = vmatprep.subr.bf16.mxu0 0
    %159 = vmatpush1.bf16.msra.mxu0 0
    %160 = vmatprep.subr.bf16.mxu0 0
    %161 = vmatpush1.bf16.msra.mxu0 0
    %162 = vmatprep.subr.bf16.mxu0 0
    %163 = vmatpush1.bf16.msra.mxu0 0
    %164 = vmatprep.mubr.bf16.mxu0 0
    %165 = vmatmul.mubr.bf16.gmra.mrb[0].mxu0 %v130
    %v166 = vpop.f32.mrb[0].mxu0
    %v167 = vadd.f32 0.0, %v166
    %v168 = vpop.f32.mrb[0].mxu0
    %v169 = vpop.f32.mrb[0].mxu0
    %v170 = vpop.f32.mrb[0].mxu0
    %171 = vdwg.mxu0
    %172 = vst [vmem:[#allocation8] sm:$0xff] %v167
    // Predicated region
    $region26: #{tpu_custom_call.1} parent=1 // pred_check
      _
    $region27: #{tpu_custom_call.1} parent=1 // pred_check_branch
      %174 = sbr.rel (0) target = $region29
    $region28: #{tpu_custom_call.1} parent=1 // pred_region
      %s176 = ssub.s32 128, 128
      %177 = vsyncadd [#allocation4], %s176
      %s179 = sshll.u32 [#allocation8], 4
      %s180 = int_to_ptr.vmem [resolvable:$true] %s179
      %182 = dma.vmem_to_hbm [thread:$0]  %s180, 128, %s3, [#allocation4]
    $region29: #{tpu_custom_call.1} parent=1 // pred_fallthru
      _
    // Predicated region
    $region30: #{tpu_custom_call.1} parent=1 // pred_check
      _
    $region31: #{tpu_custom_call.1} parent=1 // pred_check_branch
      %184 = sbr.rel (0) target = $region33
    $region32: #{tpu_custom_call.1} parent=1 // pred_region
      %185 = dma.done [#allocation4], 128
    $region33: #{tpu_custom_call.1} parent=1 // pred_fallthru
      _
    %186 = vsyncpa [#allocation3], 1
    %187 = vsyncpa [#allocation6], 1
    %188 = vsyncpa [#allocation4], 1

</llo_original>
